<compile_context>
chip_gen: v5e
topology: v5e:2x2
jax: 0.10.0
libtpu: 0.0.40
codegen_flags: <defaults>
</compile_context>

<pallas_src>
import numpy as np
import jax
import jax.numpy as jnp
from jax.experimental import pallas as pl
from jax.experimental.pallas import tpu as pltpu


def _round_up(x, m):
    return ((x + m - 1) // m) * m


def _make_hyper_kernel(D, H, use_residue):
    """Kernel over one row tile of each modality.

    l_ref/a_ref/v_ref: (tm, D)   row tiles (same rows of each modality)
    w_ref:             (D, H)    fc1 weight, pre-transposed in the wrapper
    b_ref:             (1, H)    fc1 bias
    o_ref:             (tm, 3*OW) with OW = (D if use_residue else 0) + 2H
    Column layout: [l?, fc1(l), fc1(l) | a?, fc1(a), fc1(a) | v?, fc1(v), fc1(v)]
    """

    def kernel(l_ref, a_ref, v_ref, w_ref, b_ref, o_ref):
        tm = l_ref.shape[0]
        w = w_ref[...]
        # Hoisted: JAX does not CSE broadcast_in_dim, so broadcast the bias once
        # instead of three times inside the unrolled modality loop.
        bb = jnp.broadcast_to(b_ref[...].astype(jnp.float32), (tm, H))
        col = 0
        for x_ref in (l_ref, a_ref, v_ref):
            x = x_ref[...]
            x1 = (jnp.dot(x, w, preferred_element_type=jnp.float32)
                  + bb).astype(o_ref.dtype)
            if use_residue:
                o_ref[:, col:col + D] = x
                col += D
            # Direct column-slice stores (no in-kernel concatenate temporaries).
            o_ref[:, col:col + H] = x1
            col += H
            o_ref[:, col:col + H] = x1
            col += H

    return kernel


def hyper_forward(a, v, l, dia_len, w_t, b, *, use_residue=True, tm=None):
    """Full Hyper.forward.

    a, v, l : (N, n_dim) with N == sum(dia_len)  (dia_len must be host-static)
    w_t     : (nhidden, n_dim)  -- torch nn.Linear weight layout
    b       : (nhidden,)
    returns : (N, 3 * ((n_dim if use_residue else 0) + 2*nhidden))
    """
    N = int(sum(dia_len))
    l = l[:N]
    a = a[:N]
    v = v[:N]
    D = l.shape[1]
    H, Dw = w_t.shape
    assert Dw == D, (Dw, D)

    ow = (D if use_residue else 0) + 2 * H
    out_w = 3 * ow

    itemsize = jnp.dtype(l.dtype).itemsize
    w_itemsize = jnp.dtype(w_t.dtype).itemsize

    # --- per-generation VMEM budget ---------------------------------------
    try:
        vmem_cap = int(pltpu.get_tpu_info().vmem_capacity_bytes)
    except Exception:
        vmem_cap = 64 * 1024 * 1024          # conservative (v7x) fallback
    budget = int(0.75 * vmem_cap)
    # Weight + bias are resident (constant index_map => no re-DMA), but budget
    # them double-buffered to be safe against the pipeliner's allocation.
    fixed_bytes = 2 * (H * D + H) * w_itemsize
    # Double-buffered row tiles: 3 input tiles (tm, D) + 1 output tile (tm, out_w).
    per_row_bytes = 2 * (3 * D + out_w) * itemsize

    if tm is None:
        tm_budget = max(8, ((budget - fixed_bytes) // max(per_row_bytes, 1)) // 8 * 8)
        # Ensure >= 4 grid steps when N allows: feeds both TensorCores on v7x
        # ("parallel" grid axis) and gives the DMA pipeline something to overlap.
        tm_split = max(8, _round_up(pl.cdiv(N, 4), 8))
        tm = max(8, min(tm_budget, tm_split, 1024))
    else:
        tm = max(8, _round_up(tm, 8))

    grid = pl.cdiv(N, tm)   # ragged last block handled by Pallas masking

    # Pre-transpose fc1 weight once (amortized over the whole grid): the kernel
    # then contracts (tm, D) x (D, H) with no per-tile RHS relayout.
    w = w_t.T
    b2d = b.reshape(1, H)

    footprint = fixed_bytes + tm * per_row_bytes
    vmem_limit = int(min(max(int(1.25 * footprint), 16 * 1024 * 1024),
                         int(0.75 * vmem_cap)))

    out = pl.pallas_call(
        _make_hyper_kernel(D, H, use_residue),
        out_shape=jax.ShapeDtypeStruct((N, out_w), l.dtype),
        grid_spec=pltpu.PrefetchScalarGridSpec(
            num_scalar_prefetch=0,
            grid=(grid,),
            in_specs=[
                pl.BlockSpec((tm, D), lambda i: (i, 0)),   # l row tile
                pl.BlockSpec((tm, D), lambda i: (i, 0)),   # a row tile
                pl.BlockSpec((tm, D), lambda i: (i, 0)),   # v row tile
                pl.BlockSpec((D, H), lambda i: (0, 0)),    # fc1 weight (resident)
                pl.BlockSpec((1, H), lambda i: (0, 0)),    # fc1 bias (resident)
            ],
            out_specs=pl.BlockSpec((tm, out_w), lambda i: (i, 0)),
        ),
        compiler_params=pltpu.CompilerParams(
            dimension_semantics=("parallel",),   # rows independent
            vmem_limit_bytes=vmem_limit,
        ),
    )(l, a, v, w, b2d)

    return out


def ref_forward(a, v, l, dia_len, w_t, b, *, use_residue=True):
    """Literal jnp transcription of the torch forward, for verification."""
    chunks, t = [], 0
    for i in dia_len:
        chunks += [l[t:t + i], a[t:t + i], v[t:t + i]]
        t += i
    features = jnp.concatenate(chunks, axis=0)
    x1 = features @ w_t.T + b
    out2 = jnp.concatenate([x1, x1], axis=1)
    if use_residue:
        out2 = jnp.concatenate([features, out2], axis=-1)
    ls, as_, vs = [], [], []
    feats = out2
    for i in dia_len:
        ls.append(feats[0:i]); as_.append(feats[i:2 * i]); vs.append(feats[2 * i:3 * i])
        feats = feats[3 * i:]
    return jnp.concatenate(
        [jnp.concatenate(ls, 0), jnp.concatenate(as_, 0), jnp.concatenate(vs, 0)],
        axis=-1)


def _run_case(dia_len, n_dim, nhidden, use_residue, tm, key):
    N = int(sum(dia_len))
    k_a, k_v, k_l, k_w, k_b = jax.random.split(key, 5)
    a = jax.random.normal(k_a, (N, n_dim), jnp.float32)
    v = jax.random.normal(k_v, (N, n_dim), jnp.float32)
    l = jax.random.normal(k_l, (N, n_dim), jnp.float32)
    # nn.Linear(n_dim, nhidden): weight (nhidden, n_dim), bias (nhidden,)
    w_t = jax.random.normal(k_w, (nhidden, n_dim), jnp.float32) * 0.1
    b = jax.random.normal(k_b, (nhidden,), jnp.float32) * 0.1

    out = hyper_forward(a, v, l, dia_len, w_t, b, use_residue=use_residue, tm=tm)
    out = jax.block_until_ready(out)
    ref = ref_forward(a, v, l, dia_len, w_t, b, use_residue=use_residue)

    ow = (n_dim if use_residue else 0) + 2 * nhidden
    assert out.shape == (N, 3 * ow), out.shape
    np.testing.assert_allclose(np.asarray(out), np.asarray(ref),
                               rtol=1e-4, atol=1e-4)


if __name__ == "__main__":
    key = jax.random.PRNGKey(0)

    # Case 1: small, lane-dense widths; two dialogues (N = 8), residue path.
    _run_case([3, 5], 128, 128, True, None, jax.random.fold_in(key, 0))

    # Case 2: auto tile selection + ragged last block (N = 300 -> tm 80, grid 4),
    # use_residue=False path.
    _run_case([60, 100, 140], 128, 128, False, None, jax.random.fold_in(key, 1))

    # Case 3: explicit tm=128 (grid 3, ragged 44-row last block), residue path.
    _run_case([60, 100, 140], 128, 128, True, 128, jax.random.fold_in(key, 2))

    print("KERNEL_OK")
</pallas_src>

<mosaic_0001>
module attributes {stable_mosaic.version = 11 : i64} {
  func.func @kernel(%arg0: i32, %arg1: memref<8x128xf32, #tpu.memory_space<vmem>>, %arg2: memref<8x128xf32, #tpu.memory_space<vmem>>, %arg3: memref<8x128xf32, #tpu.memory_space<vmem>>, %arg4: memref<128x128xf32, #tpu.memory_space<vmem>>, %arg5: memref<1x128xf32, #tpu.memory_space<vmem>>, %arg6: memref<8x1152xf32, #tpu.memory_space<vmem>>) attributes {dimension_semantics = [#tpu.dimension_semantics<parallel>], iteration_bounds = array<i64: 1>, scalar_prefetch = 0 : i64, scratch_operands = 0 : i64, tpu.core_type = #tpu.core_type<tc>, window_params = [{transform_indices = @transform_0, window_bounds = array<i64: 8, 128>}, {transform_indices = @transform_1, window_bounds = array<i64: 8, 128>}, {transform_indices = @transform_2, window_bounds = array<i64: 8, 128>}, {pipeline_mode = #tpu.pipeline_mode<synchronous>, transform_indices = @transform_3, window_bounds = array<i64: 128, 128>}, {pipeline_mode = #tpu.pipeline_mode<synchronous>, transform_indices = @transform_4, window_bounds = array<i64: 1, 128>}, {transform_indices = @transform_5, window_bounds = array<i64: 8, 1152>}]} {
    %c0 = arith.constant 0 : index
    %c0_0 = arith.constant 0 : index
    %0 = vector.load %arg4[%c0, %c0_0] : memref<128x128xf32, #tpu.memory_space<vmem>>, vector<128x128xf32>
    %c0_1 = arith.constant 0 : index
    %c0_2 = arith.constant 0 : index
    %1 = vector.load %arg5[%c0_1, %c0_2] : memref<1x128xf32, #tpu.memory_space<vmem>>, vector<1x128xf32>
    %2 = vector.shape_cast %1 : vector<1x128xf32> to vector<1x128xf32>
    %3 = vector.broadcast %2 : vector<1x128xf32> to vector<8x128xf32>
    %c0_3 = arith.constant 0 : index
    %c0_4 = arith.constant 0 : index
    %4 = vector.load %arg1[%c0_3, %c0_4] : memref<8x128xf32, #tpu.memory_space<vmem>>, vector<8x128xf32>
    %cst = arith.constant dense<0.000000e+00> : vector<8x128xf32>
    %5 = tpu.matmul %4, %0, %cst {dimension_numbers = #tpu.dot_dimension_numbers<[1], [0], [0], [1], [0, 0, 1, 1], [], []>} : vector<8x128xf32>, vector<128x128xf32>, vector<8x128xf32> -> vector<8x128xf32>
    %6 = arith.addf %5, %3 : vector<8x128xf32>
    %c0_5 = arith.constant 0 : index
    %c0_6 = arith.constant 0 : index
    %7 = vector.load %arg6[%c0_5, %c0_6] : memref<8x1152xf32, #tpu.memory_space<vmem>>, vector<8x128xf32>
    tpu.vector_store %arg6[%c0_5, %c0_6], %4 {strides = array<i32>} : memref<8x1152xf32, #tpu.memory_space<vmem>>, vector<8x128xf32>,
    %c0_7 = arith.constant 0 : index
    %c128 = arith.constant 128 : index
    %8 = vector.load %arg6[%c0_7, %c128] : memref<8x1152xf32, #tpu.memory_space<vmem>>, vector<8x128xf32>
    tpu.vector_store %arg6[%c0_7, %c128], %6 {strides = array<i32>} : memref<8x1152xf32, #tpu.memory_space<vmem>>, vector<8x128xf32>,
    %c0_8 = arith.constant 0 : index
    %c256 = arith.constant 256 : index
    %9 = vector.load %arg6[%c0_8, %c256] : memref<8x1152xf32, #tpu.memory_space<vmem>>, vector<8x128xf32>
    tpu.vector_store %arg6[%c0_8, %c256], %6 {strides = array<i32>} : memref<8x1152xf32, #tpu.memory_space<vmem>>, vector<8x128xf32>,
    %c0_9 = arith.constant 0 : index
    %c0_10 = arith.constant 0 : index
    %10 = vector.load %arg2[%c0_9, %c0_10] : memref<8x128xf32, #tpu.memory_space<vmem>>, vector<8x128xf32>
    %cst_11 = arith.constant dense<0.000000e+00> : vector<8x128xf32>
    %11 = tpu.matmul %10, %0, %cst_11 {dimension_numbers = #tpu.dot_dimension_numbers<[1], [0], [0], [1], [0, 0, 1, 1], [], []>} : vector<8x128xf32>, vector<128x128xf32>, vector<8x128xf32> -> vector<8x128xf32>
    %12 = arith.addf %11, %3 : vector<8x128xf32>
    %c0_12 = arith.constant 0 : index
    %c384 = arith.constant 384 : index
    %13 = vector.load %arg6[%c0_12, %c384] : memref<8x1152xf32, #tpu.memory_space<vmem>>, vector<8x128xf32>
    tpu.vector_store %arg6[%c0_12, %c384], %10 {strides = array<i32>} : memref<8x1152xf32, #tpu.memory_space<vmem>>, vector<8x128xf32>,
    %c0_13 = arith.constant 0 : index
    %c512 = arith.constant 512 : index
    %14 = vector.load %arg6[%c0_13, %c512] : memref<8x1152xf32, #tpu.memory_space<vmem>>, vector<8x128xf32>
    tpu.vector_store %arg6[%c0_13, %c512], %12 {strides = array<i32>} : memref<8x1152xf32, #tpu.memory_space<vmem>>, vector<8x128xf32>,
    %c0_14 = arith.constant 0 : index
    %c640 = arith.constant 640 : index
    %15 = vector.load %arg6[%c0_14, %c640] : memref<8x1152xf32, #tpu.memory_space<vmem>>, vector<8x128xf32>
    tpu.vector_store %arg6[%c0_14, %c640], %12 {strides = array<i32>} : memref<8x1152xf32, #tpu.memory_space<vmem>>, vector<8x128xf32>,
    %c0_15 = arith.constant 0 : index
    %c0_16 = arith.constant 0 : index
    %16 = vector.load %arg3[%c0_15, %c0_16] : memref<8x128xf32, #tpu.memory_space<vmem>>, vector<8x128xf32>
    %cst_17 = arith.constant dense<0.000000e+00> : vector<8x128xf32>
    %17 = tpu.matmul %16, %0, %cst_17 {dimension_numbers = #tpu.dot_dimension_numbers<[1], [0], [0], [1], [0, 0, 1, 1], [], []>} : vector<8x128xf32>, vector<128x128xf32>, vector<8x128xf32> -> vector<8x128xf32>
    %18 = arith.addf %17, %3 : vector<8x128xf32>
    %c0_18 = arith.constant 0 : index
    %c768 = arith.constant 768 : index
    %19 = vector.load %arg6[%c0_18, %c768] : memref<8x1152xf32, #tpu.memory_space<vmem>>, vector<8x128xf32>
    tpu.vector_store %arg6[%c0_18, %c768], %16 {strides = array<i32>} : memref<8x1152xf32, #tpu.memory_space<vmem>>, vector<8x128xf32>,
    %c0_19 = arith.constant 0 : index
    %c896 = arith.constant 896 : index
    %20 = vector.load %arg6[%c0_19, %c896] : memref<8x1152xf32, #tpu.memory_space<vmem>>, vector<8x128xf32>
    tpu.vector_store %arg6[%c0_19, %c896], %18 {strides = array<i32>} : memref<8x1152xf32, #tpu.memory_space<vmem>>, vector<8x128xf32>,
    %c0_20 = arith.constant 0 : index
    %c1024 = arith.constant 1024 : index
    %21 = vector.load %arg6[%c0_20, %c1024] : memref<8x1152xf32, #tpu.memory_space<vmem>>, vector<8x128xf32>
    tpu.vector_store %arg6[%c0_20, %c1024], %18 {strides = array<i32>} : memref<8x1152xf32, #tpu.memory_space<vmem>>, vector<8x128xf32>,
    return
  }
  func.func @transform_0(%arg0: i32) -> (i32, i32) {
    %c0_i32 = arith.constant 0 : i32
    %c0_i32_0 = arith.constant 0 : i32
    return %arg0, %c0_i32 : i32, i32
  }
  func.func @transform_1(%arg0: i32) -> (i32, i32) {
    %c0_i32 = arith.constant 0 : i32
    %c0_i32_0 = arith.constant 0 : i32
    return %arg0, %c0_i32 : i32, i32
  }
  func.func @transform_2(%arg0: i32) -> (i32, i32) {
    %c0_i32 = arith.constant 0 : i32
    %c0_i32_0 = arith.constant 0 : i32
    return %arg0, %c0_i32 : i32, i32
  }
  func.func @transform_3(%arg0: i32) -> (i32, i32) {
    %c0_i32 = arith.constant 0 : i32
    %c0_i32_0 = arith.constant 0 : i32
    %c0_i32_1 = arith.constant 0 : i32
    return %c0_i32, %c0_i32_0 : i32, i32
  }
  func.func @transform_4(%arg0: i32) -> (i32, i32) {
    %c0_i32 = arith.constant 0 : i32
    %c0_i32_0 = arith.constant 0 : i32
    %c0_i32_1 = arith.constant 0 : i32
    return %c0_i32, %c0_i32_0 : i32, i32
  }
  func.func @transform_5(%arg0: i32) -> (i32, i32) {
    %c0_i32 = arith.constant 0 : i32
    %c0_i32_0 = arith.constant 0 : i32
    return %arg0, %c0_i32 : i32, i32
  }
}

</mosaic_0001>

<llo_original>
// kernel: tpu_custom_call.1
$region0: #{tpu_custom_call.1}
  #allocation0 [shape = 'u32[]', space=smem, size = 0x4, offset = 0x4, fixed_abs, tag = 'smem constant byte address 0x4 - core index']
  #allocation1 [shape = 'u32[72,128]{1,0:T(1,128)}', space=vmem, size = 0x9000, scoped, tag = 'internal scratch']
  %s0 = inlined_call_operand.hbm [shape: f32[8,128], index: 0, kind: input, shape index: {}]
  %s1 = inlined_call_operand.hbm [shape: f32[8,128], index: 1, kind: input, shape index: {}]
  %s2 = inlined_call_operand.hbm [shape: f32[8,128], index: 2, kind: input, shape index: {}]
  %s3 = inlined_call_operand.hbm [shape: f32[128,128], index: 3, kind: input, shape index: {}]
  %s4 = inlined_call_operand.vmem [shape: f32[1,128], index: 4, kind: input, shape index: {}]
  %s5 = inlined_call_operand.hbm [shape: f32[8,1152], index: 5, kind: output, shape index: {}]
  %s6 = sld [smem:[#allocation0]]
  $region46: #{tpu_custom_call.1} parent=0
    _
  %s8 = ssub.s32 1, %s6
  %s9 = scalar_select 0, %s8, %s6
  $region1: #{tpu_custom_call.1} parent=0
    #allocation2 [shape = 'u8[4096]{0}', space=vmem, size = 0x1000, scoped, tag = 'input window, operand 0, single buffered']
    #allocation3 [shape = 's32[1]{0}', space=sflag, size = 0x4, scoped, tag = 'scoped memory for tpu_custom_call.1']
    #allocation4 [shape = 's32[1]{0}', space=sflag, size = 0x4, scoped, tag = 'scoped memory for tpu_custom_call.1']
    #allocation5 [shape = 'u8[4096]{0}', space=vmem, size = 0x1000, scoped, tag = 'input window, operand 1, single buffered']
    #allocation6 [shape = 's32[1]{0}', space=sflag, size = 0x4, scoped, tag = 'scoped memory for tpu_custom_call.1']
    #allocation7 [shape = 'u8[4096]{0}', space=vmem, size = 0x1000, scoped, tag = 'input window, operand 2, single buffered']
    #allocation8 [shape = 'u8[65536]{0}', space=vmem, size = 0x10000, scoped, tag = 'input window, operand 3, single buffered']
    #allocation9 [shape = 's32[1]{0}', space=sflag, size = 0x4, scoped, tag = 'scoped memory for tpu_custom_call.1']
    #allocation10 [shape = 'u8[36864]{0}', space=vmem, size = 0x9000, scoped, tag = 'output window, operand 0, single buffered']
    %10 = vsyncpa [#allocation3], 0
    %11 = vsyncpa [#allocation6], 0
    %12 = vsyncpa [#allocation9], 0
    %13 = vsyncpa [#allocation4], 0
    // Predicated region
    $region2: #{tpu_custom_call.1} parent=1 // pred_check
      _
    $region3: #{tpu_custom_call.1} parent=1 // pred_check_branch
      %15 = sbr.rel (0) target = $region5
    $region4: #{tpu_custom_call.1} parent=1 // pred_region
      %17 = vsyncadd [#allocation3], 0
      %s19 = sshll.u32 %s0, 4
      %s20 = int_to_ptr.hbm [resolvable:$true] %s19
      %s21 = sshll.u32 [#allocation2], 4
      %s22 = int_to_ptr.vmem [resolvable:$true] %s21
      %24 = dma.hbm_to_vmem [thread:$0]  %s20, 128, %s22, [#allocation3]
    $region5: #{tpu_custom_call.1} parent=1 // pred_fallthru
      _
    // Predicated region
    $region6: #{tpu_custom_call.1} parent=1 // pred_check
      _
    $region7: #{tpu_custom_call.1} parent=1 // pred_check_branch
      %26 = sbr.rel (0) target = $region9
    $region8: #{tpu_custom_call.1} parent=1 // pred_region
      %28 = vsyncadd [#allocation6], 0
      %s30 = sshll.u32 %s1, 4
      %s31 = int_to_ptr.hbm [resolvable:$true] %s30
      %s32 = sshll.u32 [#allocation5], 4
      %s33 = int_to_ptr.vmem [resolvable:$true] %s32
      %35 = dma.hbm_to_vmem [thread:$0]  %s31, 128, %s33, [#allocation6]
    $region9: #{tpu_custom_call.1} parent=1 // pred_fallthru
      _
    // Predicated region
    $region10: #{tpu_custom_call.1} parent=1 // pred_check
      _
    $region11: #{tpu_custom_call.1} parent=1 // pred_check_branch
      %37 = sbr.rel (0) target = $region13
    $region12: #{tpu_custom_call.1} parent=1 // pred_region
      %39 = vsyncadd [#allocation6], 0
      %s41 = sshll.u32 %s2, 4
      %s42 = int_to_ptr.hbm [resolvable:$true] %s41
      %s43 = sshll.u32 [#allocation7], 4
      %s44 = int_to_ptr.vmem [resolvable:$true] %s43
      %46 = dma.hbm_to_vmem [thread:$0]  %s42, 128, %s44, [#allocation6]
    $region13: #{tpu_custom_call.1} parent=1 // pred_fallthru
      _
    // Predicated region
    $region14: #{tpu_custom_call.1} parent=1 // pred_check
      _
    $region15: #{tpu_custom_call.1} parent=1 // pred_check_branch
      %48 = sbr.rel (0) target = $region17
    $region16: #{tpu_custom_call.1} parent=1 // pred_region
      %50 = vsyncadd [#allocation9], 0
      %s51 = sshll.u32 %s3, 4
      %s52 = int_to_ptr.hbm [resolvable:$true] %s51
      %s53 = sshll.u32 [#allocation8], 4
      %s54 = int_to_ptr.vmem [resolvable:$true] %s53
      %59 = dma.hbm_to_vmem [thread:$0]  %s52, 2048, %s54, [#allocation9], 128, 128, 8
    $region17: #{tpu_custom_call.1} parent=1 // pred_fallthru
      _
    // Predicated region
    $region18: #{tpu_custom_call.1} parent=1 // pred_check
      _
    $region19: #{tpu_custom_call.1} parent=1 // pred_check_branch
      %61 = sbr.rel (0) target = $region21
    $region20: #{tpu_custom_call.1} parent=1 // pred_region
      _
    $region21: #{tpu_custom_call.1} parent=1 // pred_fallthru
      _
    // Predicated region
    $region22: #{tpu_custom_call.1} parent=1 // pred_check
      _
    $region23: #{tpu_custom_call.1} parent=1 // pred_check_branch
      %63 = sbr.rel (0) target = $region25
    $region24: #{tpu_custom_call.1} parent=1 // pred_region
      %65 = dma.done [#allocation3], 128
    $region25: #{tpu_custom_call.1} parent=1 // pred_fallthru
      _
    // Predicated region
    $region26: #{tpu_custom_call.1} parent=1 // pred_check
      _
    $region27: #{tpu_custom_call.1} parent=1 // pred_check_branch
      %67 = sbr.rel (0) target = $region29
    $region28: #{tpu_custom_call.1} parent=1 // pred_region
      %69 = dma.done [#allocation6], 128
    $region29: #{tpu_custom_call.1} parent=1 // pred_fallthru
      _
    // Predicated region
    $region30: #{tpu_custom_call.1} parent=1 // pred_check
      _
    $region31: #{tpu_custom_call.1} parent=1 // pred_check_branch
      %71 = sbr.rel (0) target = $region33
    $region32: #{tpu_custom_call.1} parent=1 // pred_region
      %73 = dma.done [#allocation6], 128
    $region33: #{tpu_custom_call.1} parent=1 // pred_fallthru
      _
    // Predicated region
    $region34: #{tpu_custom_call.1} parent=1 // pred_check
      _
    $region35: #{tpu_custom_call.1} parent=1 // pred_check_branch
      %75 = sbr.rel (0) target = $region37
    $region36: #{tpu_custom_call.1} parent=1 // pred_region
      %77 = dma.done [#allocation9], 2048
    $region37: #{tpu_custom_call.1} parent=1 // pred_fallthru
      _
    %v78 = vld [vmem:[#allocation8] sm:$0xff]
    %v79 = vld [vmem:[#allocation8 + $0x8] sm:$0xff]
    %v80 = vld [vmem:[#allocation8 + $0x10] sm:$0xff]
    %v81 = vld [vmem:[#allocation8 + $0x18] sm:$0xff]
    %v82 = vld [vmem:[#allocation8 + $0x20] sm:$0xff]
    %v83 = vld [vmem:[#allocation8 + $0x28] sm:$0xff]
    %v84 = vld [vmem:[#allocation8 + $0x30] sm:$0xff]
    %v85 = vld [vmem:[#allocation8 + $0x38] sm:$0xff]
    %v86 = vld [vmem:[#allocation8 + $0x40] sm:$0xff]
    %v87 = vld [vmem:[#allocation8 + $0x48] sm:$0xff]
    %v88 = vld [vmem:[#allocation8 + $0x50] sm:$0xff]
    %v89 = vld [vmem:[#allocation8 + $0x58] sm:$0xff]
    %v90 = vld [vmem:[#allocation8 + $0x60] sm:$0xff]
    %v91 = vld [vmem:[#allocation8 + $0x68] sm:$0xff]
    %v92 = vld [vmem:[#allocation8 + $0x70] sm:$0xff]
    %v93 = vld [vmem:[#allocation8 + $0x78] sm:$0xff]
    %v94 = vld [vmem:[%s4] sm:$0x1]
    %v96 = vperm.slane %v94, 0
    %v98 = vld [vmem:[#allocation2] sm:$0xff]
    %99 = vmatpush.msra.mxu0 %v93
    %100 = vmatpush.msra.mxu0 %v92
    %101 = vmatpush.msra.mxu0 %v91
    %102 = vmatpush.msra.mxu0 %v90
    %103 = vmatpush.msra.mxu0 %v89
    %104 = vmatpush.msra.mxu0 %v88
    %105 = vmatpush.msra.mxu0 %v87
    %106 = vmatpush.msra.mxu0 %v86
    %107 = vmatpush.msra.mxu0 %v85
    %108 = vmatpush.msra.mxu0 %v84
    %109 = vmatpush.msra.mxu0 %v83
    %110 = vmatpush.msra.mxu0 %v82
    %111 = vmatpush.msra.mxu0 %v81
    %112 = vmatpush.msra.mxu0 %v80
    %113 = vmatpush.msra.mxu0 %v79
    %114 = vmatpush.msra.mxu0 %v78
    %115 = vmatmul.f32.gmra.mxu0 %v98
    %v116 = vpop.f32.mrf.mxu0
    %v117 = vadd.f32 %v96, %v116
    %118 = vdwg.mxu0
    %119 = vst [vmem:[#allocation10] sm:$0xff] %v98
    %120 = vst [vmem:[#allocation10 + $0x8] sm:$0xff] %v117
    %121 = vst [vmem:[#allocation10 + $0x10] sm:$0xff] %v117
    %v122 = vld [vmem:[#allocation5] sm:$0xff]
    %123 = vmatpush.msra.mxu0 %v93
    %124 = vmatpush.msra.mxu0 %v92
    %125 = vmatpush.msra.mxu0 %v91
    %126 = vmatpush.msra.mxu0 %v90
    %127 = vmatpush.msra.mxu0 %v89
    %128 = vmatpush.msra.mxu0 %v88
    %129 = vmatpush.msra.mxu0 %v87
    %130 = vmatpush.msra.mxu0 %v86
    %131 = vmatpush.msra.mxu0 %v85
    %132 = vmatpush.msra.mxu0 %v84
    %133 = vmatpush.msra.mxu0 %v83
    %134 = vmatpush.msra.mxu0 %v82
    %135 = vmatpush.msra.mxu0 %v81
    %136 = vmatpush.msra.mxu0 %v80
    %137 = vmatpush.msra.mxu0 %v79
    %138 = vmatpush.msra.mxu0 %v78
    %139 = vmatmul.f32.gmra.mxu0 %v122
    %v140 = vpop.f32.mrf.mxu0
    %v141 = vadd.f32 %v96, %v140
    %142 = vdwg.mxu0
    %143 = vst [vmem:[#allocation10 + $0x18] sm:$0xff] %v122
    %144 = vst [vmem:[#allocation10 + $0x20] sm:$0xff] %v141
    %145 = vst [vmem:[#allocation10 + $0x28] sm:$0xff] %v141
    %v146 = vld [vmem:[#allocation7] sm:$0xff]
    %147 = vmatpush.msra.mxu0 %v93
    %148 = vmatpush.msra.mxu0 %v92
    %149 = vmatpush.msra.mxu0 %v91
    %150 = vmatpush.msra.mxu0 %v90
    %151 = vmatpush.msra.mxu0 %v89
    %152 = vmatpush.msra.mxu0 %v88
    %153 = vmatpush.msra.mxu0 %v87
    %154 = vmatpush.msra.mxu0 %v86
    %155 = vmatpush.msra.mxu0 %v85
    %156 = vmatpush.msra.mxu0 %v84
    %157 = vmatpush.msra.mxu0 %v83
    %158 = vmatpush.msra.mxu0 %v82
    %159 = vmatpush.msra.mxu0 %v81
    %160 = vmatpush.msra.mxu0 %v80
    %161 = vmatpush.msra.mxu0 %v79
    %162 = vmatpush.msra.mxu0 %v78
    %163 = vmatmul.f32.gmra.mxu0 %v146
    %v164 = vpop.f32.mrf.mxu0
    %v165 = vadd.f32 %v96, %v164
    %166 = vdwg.mxu0
    %167 = vst [vmem:[#allocation10 + $0x30] sm:$0xff] %v146
    %168 = vst [vmem:[#allocation10 + $0x38] sm:$0xff] %v165
    %169 = vst [vmem:[#allocation10 + $0x40] sm:$0xff] %v165
    // Predicated region
    $region38: #{tpu_custom_call.1} parent=1 // pred_check
      _
    $region39: #{tpu_custom_call.1} parent=1 // pred_check_branch
      %171 = sbr.rel (0) target = $region41
    $region40: #{tpu_custom_call.1} parent=1 // pred_region
      %173 = vsyncadd [#allocation4], 0
      %s175 = sshll.u32 [#allocation10], 4
      %s176 = int_to_ptr.vmem [resolvable:$true] %s175
      %s177 = sshll.u32 %s5, 4
      %s178 = int_to_ptr.hbm [resolvable:$true] %s177
      %180 = dma.vmem_to_hbm [thread:$0]  %s176, 1152, %s178, [#allocation4]
    $region41: #{tpu_custom_call.1} parent=1 // pred_fallthru
      _
    // Predicated region
    $region42: #{tpu_custom_call.1} parent=1 // pred_check
      _
    $region43: #{tpu_custom_call.1} parent=1 // pred_check_branch
      %182 = sbr.rel (0) target = $region45
    $region44: #{tpu_custom_call.1} parent=1 // pred_region
      %184 = dma.done [#allocation4], 1152
    $region45: #{tpu_custom_call.1} parent=1 // pred_fallthru
      _
    %185 = vsyncpa [#allocation3], 1
    %186 = vsyncpa [#allocation6], 1
    %187 = vsyncpa [#allocation9], 1
    %188 = vsyncpa [#allocation4], 1

</llo_original>
